<compile_context>
chip_gen: v5e
topology: v5e:2x2
jax: 0.10.0
libtpu: 0.0.40
codegen_flags: <defaults>
</compile_context>

<pallas_src>
import jax
import jax.numpy as jnp
from jax import lax
from jax.experimental import pallas as pl

# ---- problem sizes (consistent with a 2x4x16x16 input) -----------------------
B, C, H, W = 2, 4, 16, 16
IN_DIM = C * H * W            # 1024
BACK_DIM = 64                 # backbone feature dim
REP_DIM = 32                  # final_dim_rep
NUM_CLASSES = 2
LANES = 128                   # lane-dense width for the fused head / cls / output

# ---- packed-parameter buffer layout (rows x 128 lanes, f32) -------------------
W_HEADS_R0 = 0                        # rows   0..63  : [whs | whl | 0]      (64, 128)
W_CLS_R0 = BACK_DIM                   # rows  64..191 : block-diag ws/wl     (128, 128)
BB_ROW = W_CLS_R0 + LANES             # row  192      : backbone bias (cols 0:64)
B_HEADS_ROW = BB_ROW + 8              # row  200      : [bhs | bhl | 0]
B_CLS_ROW = B_HEADS_ROW + 8           # row  208      : [bs | bl | 0]
PACK_ROWS = B_CLS_ROW + 8             # 216 rows total (sublane-aligned)


def _gelu_exact(x):
    # matches torch.nn.GELU() default (approximate='none')
    return 0.5 * x * (1.0 + lax.erf(x * 0.7071067811865476))


def classifier_kernel(x_ref, wb_ref, packed_ref, out_ref):
    # x_ref:      (B, IN_DIM)
    # wb_ref:     (IN_DIM, BACK_DIM)   backbone linear weight
    # packed_ref: (PACK_ROWS, 128)     all remaining weights/biases, packed
    # out_ref:    (B, 128)             cols 0:2 speaker logits, 2:4 label logits

    x = x_ref[...]

    # ---- backbone: Flatten -> Linear -> ReLU ----------------------------------
    fe = jnp.dot(x, wb_ref[...], preferred_element_type=jnp.float32)
    fe = jnp.maximum(fe + packed_ref[BB_ROW:BB_ROW + 1, 0:BACK_DIM], 0.0)   # (B, 64)

    # ---- both SiameseHeads fused into one (64,128) matmul + one GELU ----------
    w_heads = packed_ref[W_HEADS_R0:W_HEADS_R0 + BACK_DIM, :]               # (64, 128)
    h = jnp.dot(fe, w_heads, preferred_element_type=jnp.float32)
    h = h + packed_ref[B_HEADS_ROW:B_HEADS_ROW + 1, :]
    # cols 64:128 are zero-padded -> GELU(0) = 0, harmless junk lanes.
    g = _gelu_exact(h)                                                      # (B, 128)
    # Dropout is identity in eval mode (inference kernel).

    # ---- both classifier Linears fused into one block-diagonal matmul ---------
    w_cls = packed_ref[W_CLS_R0:W_CLS_R0 + LANES, :]                        # (128, 128)
    logits = jnp.dot(g, w_cls, preferred_element_type=jnp.float32)
    logits = logits + packed_ref[B_CLS_ROW:B_CLS_ROW + 1, :]                # (B, 128)

    out_ref[...] = logits.astype(out_ref.dtype)


def pack_params(p):
    """Pack all small weights/biases into one (PACK_ROWS, 128) f32 buffer."""
    packed = jnp.zeros((PACK_ROWS, LANES), jnp.float32)
    # fused head weight: [whs | whl], zero-padded to 128 lanes
    packed = packed.at[W_HEADS_R0:W_HEADS_R0 + BACK_DIM, 0:REP_DIM].set(p["whs"])
    packed = packed.at[W_HEADS_R0:W_HEADS_R0 + BACK_DIM, REP_DIM:2 * REP_DIM].set(p["whl"])
    # block-diagonal classifier weight (rows 64:128 and cols 4:128 stay zero)
    packed = packed.at[W_CLS_R0:W_CLS_R0 + REP_DIM, 0:NUM_CLASSES].set(p["ws"])
    packed = packed.at[W_CLS_R0 + REP_DIM:W_CLS_R0 + 2 * REP_DIM,
                       NUM_CLASSES:2 * NUM_CLASSES].set(p["wl"])
    # biases
    packed = packed.at[BB_ROW, 0:BACK_DIM].set(p["bb"][0])
    packed = packed.at[B_HEADS_ROW, 0:REP_DIM].set(p["bhs"][0])
    packed = packed.at[B_HEADS_ROW, REP_DIM:2 * REP_DIM].set(p["bhl"][0])
    packed = packed.at[B_CLS_ROW, 0:NUM_CLASSES].set(p["bs"][0])
    packed = packed.at[B_CLS_ROW, NUM_CLASSES:2 * NUM_CLASSES].set(p["bl"][0])
    return packed


def classifier_forward(x_nchw, wb, packed):
    """x_nchw: (B, C, H, W) f32. Returns (logit_speaker, logit_label), each (B, 2)."""
    b = x_nchw.shape[0]
    x_flat = x_nchw.reshape(b, -1)   # same row-major flatten as torch.flatten(x, 1)

    out = pl.pallas_call(
        classifier_kernel,
        out_shape=jax.ShapeDtypeStruct((b, LANES), jnp.float32),
        in_specs=[
            pl.BlockSpec(x_flat.shape, lambda: (0, 0)),
            pl.BlockSpec(wb.shape, lambda: (0, 0)),
            pl.BlockSpec(packed.shape, lambda: (0, 0)),
        ],
        out_specs=pl.BlockSpec((b, LANES), lambda: (0, 0)),
    )(x_flat, wb, packed)

    return out[:, 0:NUM_CLASSES], out[:, NUM_CLASSES:2 * NUM_CLASSES]


def init_params():
    """Deterministic synthetic 'pre-trained' parameters (logical, unpacked)."""
    key = jax.random.PRNGKey(0)
    ks = jax.random.split(key, 10)

    def lin(kw, kb, fan_in, fan_out):
        scale = 1.0 / jnp.sqrt(jnp.float32(fan_in))
        w = jax.random.uniform(kw, (fan_in, fan_out), jnp.float32, -scale, scale)
        b = jax.random.uniform(kb, (1, fan_out), jnp.float32, -scale, scale)
        return w, b

    wb, bb = lin(ks[0], ks[1], IN_DIM, BACK_DIM)        # backbone linear
    whs, bhs = lin(ks[2], ks[3], BACK_DIM, REP_DIM)     # speaker SiameseHead
    whl, bhl = lin(ks[4], ks[5], BACK_DIM, REP_DIM)     # label SiameseHead
    ws, bs = lin(ks[6], ks[7], REP_DIM, NUM_CLASSES)    # speaker final linear
    wl, bl = lin(ks[8], ks[9], REP_DIM, NUM_CLASSES)    # label final linear

    return dict(wb=wb, bb=bb, whs=whs, bhs=bhs, whl=whl, bhl=bhl,
                ws=ws, bs=bs, wl=wl, bl=bl)


if __name__ == "__main__":
    params = init_params()
    packed = pack_params(params)
    x = jax.random.normal(jax.random.PRNGKey(0), (B, C, H, W), dtype=jnp.float32)

    logit_speaker, logit_label = classifier_forward(x, params["wb"], packed)
    jax.block_until_ready((logit_speaker, logit_label))

    assert logit_speaker.shape == (B, NUM_CLASSES)
    assert logit_label.shape == (B, NUM_CLASSES)

    # quick sanity check vs a pure-JAX reference using the original (unpacked) params
    def ref(x_nchw, p):
        xf = x_nchw.reshape(x_nchw.shape[0], -1)
        fe = jnp.maximum(xf @ p["wb"] + p["bb"], 0.0)
        g = lambda t: 0.5 * t * (1.0 + lax.erf(t / jnp.sqrt(2.0)))
        ls = g(fe @ p["whs"] + p["bhs"]) @ p["ws"] + p["bs"]
        ll = g(fe @ p["whl"] + p["bhl"]) @ p["wl"] + p["bl"]
        return ls, ll

    rs, rl = ref(x, params)
    assert jnp.allclose(logit_speaker, rs, atol=1e-4, rtol=1e-4)
    assert jnp.allclose(logit_label, rl, atol=1e-4, rtol=1e-4)

    print("KERNEL_OK")
</pallas_src>

<mosaic_0001>
module attributes {stable_mosaic.version = 11 : i64} {
  func.func @classifier_kernel(%arg0: memref<2x1024xf32, #tpu.memory_space<vmem>>, %arg1: memref<1024x64xf32, #tpu.memory_space<vmem>>, %arg2: memref<216x128xf32, #tpu.memory_space<vmem>>, %arg3: memref<2x128xf32, #tpu.memory_space<vmem>>) attributes {dimension_semantics = [], scalar_prefetch = 0 : i64, scratch_operands = 0 : i64, tpu.core_type = #tpu.core_type<tc>} {
    %c0 = arith.constant 0 : index
    %c0_0 = arith.constant 0 : index
    %0 = vector.load %arg0[%c0, %c0_0] : memref<2x1024xf32, #tpu.memory_space<vmem>>, vector<2x1024xf32>
    %c0_1 = arith.constant 0 : index
    %c0_2 = arith.constant 0 : index
    %1 = vector.load %arg1[%c0_1, %c0_2] : memref<1024x64xf32, #tpu.memory_space<vmem>>, vector<1024x64xf32>
    %cst = arith.constant dense<0.000000e+00> : vector<2x64xf32>
    %2 = tpu.matmul %0, %1, %cst {dimension_numbers = #tpu.dot_dimension_numbers<[1], [0], [0], [1], [0, 0, 1, 1], [], []>} : vector<2x1024xf32>, vector<1024x64xf32>, vector<2x64xf32> -> vector<2x64xf32>
    %c192 = arith.constant 192 : index
    %c0_3 = arith.constant 0 : index
    %3 = vector.load %arg2[%c192, %c0_3] : memref<216x128xf32, #tpu.memory_space<vmem>>, vector<1x64xf32>
    %4 = vector.broadcast %3 : vector<1x64xf32> to vector<2x64xf32>
    %5 = arith.addf %2, %4 : vector<2x64xf32>
    %cst_4 = arith.constant 0.000000e+00 : f32
    %6 = vector.broadcast %cst_4 : f32 to vector<2x64xf32>
    %7 = arith.maximumf %5, %6 : vector<2x64xf32>
    %c0_5 = arith.constant 0 : index
    %c0_6 = arith.constant 0 : index
    %8 = vector.load %arg2[%c0_5, %c0_6] : memref<216x128xf32, #tpu.memory_space<vmem>>, vector<64x128xf32>
    %cst_7 = arith.constant dense<0.000000e+00> : vector<2x128xf32>
    %9 = tpu.matmul %7, %8, %cst_7 {dimension_numbers = #tpu.dot_dimension_numbers<[1], [0], [0], [1], [0, 0, 1, 1], [], []>} : vector<2x64xf32>, vector<64x128xf32>, vector<2x128xf32> -> vector<2x128xf32>
    %c200 = arith.constant 200 : index
    %c0_8 = arith.constant 0 : index
    %10 = vector.load %arg2[%c200, %c0_8] : memref<216x128xf32, #tpu.memory_space<vmem>>, vector<1x128xf32>
    %11 = vector.broadcast %10 : vector<1x128xf32> to vector<2x128xf32>
    %12 = arith.addf %9, %11 : vector<2x128xf32>
    %cst_9 = arith.constant 5.000000e-01 : f32
    %13 = vector.broadcast %cst_9 : f32 to vector<2x128xf32>
    %14 = arith.mulf %13, %12 : vector<2x128xf32>
    %cst_10 = arith.constant 0.707106769 : f32
    %15 = vector.broadcast %cst_10 : f32 to vector<2x128xf32>
    %16 = arith.mulf %12, %15 : vector<2x128xf32>
    %17 = math.erf %16 : vector<2x128xf32>
    %cst_11 = arith.constant 1.000000e+00 : f32
    %18 = vector.broadcast %cst_11 : f32 to vector<2x128xf32>
    %19 = arith.addf %18, %17 : vector<2x128xf32>
    %20 = arith.mulf %14, %19 : vector<2x128xf32>
    %c64 = arith.constant 64 : index
    %c0_12 = arith.constant 0 : index
    %21 = vector.load %arg2[%c64, %c0_12] : memref<216x128xf32, #tpu.memory_space<vmem>>, vector<128x128xf32>
    %cst_13 = arith.constant dense<0.000000e+00> : vector<2x128xf32>
    %22 = tpu.matmul %20, %21, %cst_13 {dimension_numbers = #tpu.dot_dimension_numbers<[1], [0], [0], [1], [0, 0, 1, 1], [], []>} : vector<2x128xf32>, vector<128x128xf32>, vector<2x128xf32> -> vector<2x128xf32>
    %c208 = arith.constant 208 : index
    %c0_14 = arith.constant 0 : index
    %23 = vector.load %arg2[%c208, %c0_14] : memref<216x128xf32, #tpu.memory_space<vmem>>, vector<1x128xf32>
    %24 = vector.broadcast %23 : vector<1x128xf32> to vector<2x128xf32>
    %25 = arith.addf %22, %24 : vector<2x128xf32>
    %c0_15 = arith.constant 0 : index
    %c0_16 = arith.constant 0 : index
    %26 = vector.load %arg3[%c0_15, %c0_16] : memref<2x128xf32, #tpu.memory_space<vmem>>, vector<2x128xf32>
    tpu.vector_store %arg3[%c0_15, %c0_16], %25 {strides = array<i32>} : memref<2x128xf32, #tpu.memory_space<vmem>>, vector<2x128xf32>,
    return
  }
}

</mosaic_0001>

<llo_original>
// kernel: tpu_custom_call.1
$region0: #{tpu_custom_call.1}
  #allocation0 [shape = 'u32[]', space=smem, size = 0x4, offset = 0x4, fixed_abs, tag = 'smem constant byte address 0x4 - core index']
  #allocation1 [shape = 'u32[72,128]{1,0:T(1,128)}', space=vmem, size = 0x9000, scoped, tag = 'internal scratch']
  %s0 = inlined_call_operand.vmem [shape: f32[2,1024], index: 0, kind: input, shape index: {}]
  %s1 = inlined_call_operand.vmem [shape: f32[1024,64], index: 1, kind: input, shape index: {}]
  %s2 = inlined_call_operand.vmem [shape: f32[216,128], index: 2, kind: input, shape index: {}]
  %s3 = inlined_call_operand.hbm [shape: f32[2,128], index: 3, kind: output, shape index: {}]
  %s4 = sld [smem:[#allocation0]]
  $region22: #{tpu_custom_call.1} parent=0
    _
  %s6 = ssub.s32 1, %s4
  %s7 = scalar_select 0, %s6, %s4
  $region1: #{tpu_custom_call.1} parent=0
    #allocation2 [shape = 'u8[1024]{0}', space=vmem, size = 0x400, scoped, tag = 'output window, operand 0, single buffered']
    #allocation3 [shape = 's32[1]{0}', space=sflag, size = 0x4, scoped, tag = 'scoped memory for tpu_custom_call.1']
    %8 = vsyncpa [#allocation3], 0
    // Predicated region
    $region2: #{tpu_custom_call.1} parent=1 // pred_check
      _
    $region3: #{tpu_custom_call.1} parent=1 // pred_check_branch
      %10 = sbr.rel (0) target = $region5
    $region4: #{tpu_custom_call.1} parent=1 // pred_region
      _
    $region5: #{tpu_custom_call.1} parent=1 // pred_fallthru
      _
    // Predicated region
    $region6: #{tpu_custom_call.1} parent=1 // pred_check
      _
    $region7: #{tpu_custom_call.1} parent=1 // pred_check_branch
      %12 = sbr.rel (0) target = $region9
    $region8: #{tpu_custom_call.1} parent=1 // pred_region
      _
    $region9: #{tpu_custom_call.1} parent=1 // pred_fallthru
      _
    // Predicated region
    $region10: #{tpu_custom_call.1} parent=1 // pred_check
      _
    $region11: #{tpu_custom_call.1} parent=1 // pred_check_branch
      %14 = sbr.rel (0) target = $region13
    $region12: #{tpu_custom_call.1} parent=1 // pred_region
      _
    $region13: #{tpu_custom_call.1} parent=1 // pred_fallthru
      _
    %v15 = vld [vmem:[%s0] sm:$0xff]
    %v16 = vld [vmem:[%s0 + $0x8] sm:$0xff]
    %v17 = vld [vmem:[%s1] sm:$0xff]
    %v18 = vld [vmem:[%s1 + $0x8] sm:$0xff]
    %v19 = vld [vmem:[%s1 + $0x10] sm:$0xff]
    %v20 = vld [vmem:[%s1 + $0x18] sm:$0xff]
    %v21 = vld [vmem:[%s1 + $0x20] sm:$0xff]
    %v22 = vld [vmem:[%s1 + $0x28] sm:$0xff]
    %v23 = vld [vmem:[%s1 + $0x30] sm:$0xff]
    %v24 = vld [vmem:[%s1 + $0x38] sm:$0xff]
    %v25 = vld [vmem:[%s1 + $0x40] sm:$0xff]
    %v26 = vld [vmem:[%s1 + $0x48] sm:$0xff]
    %v27 = vld [vmem:[%s1 + $0x50] sm:$0xff]
    %v28 = vld [vmem:[%s1 + $0x58] sm:$0xff]
    %v29 = vld [vmem:[%s1 + $0x60] sm:$0xff]
    %v30 = vld [vmem:[%s1 + $0x68] sm:$0xff]
    %v31 = vld [vmem:[%s1 + $0x70] sm:$0xff]
    %v32 = vld [vmem:[%s1 + $0x78] sm:$0xff]
    %v33 = vld [vmem:[%s1 + $0x80] sm:$0xff]
    %v34 = vld [vmem:[%s1 + $0x88] sm:$0xff]
    %v35 = vld [vmem:[%s1 + $0x90] sm:$0xff]
    %v36 = vld [vmem:[%s1 + $0x98] sm:$0xff]
    %v37 = vld [vmem:[%s1 + $0xa0] sm:$0xff]
    %v38 = vld [vmem:[%s1 + $0xa8] sm:$0xff]
    %v39 = vld [vmem:[%s1 + $0xb0] sm:$0xff]
    %v40 = vld [vmem:[%s1 + $0xb8] sm:$0xff]
    %v41 = vld [vmem:[%s1 + $0xc0] sm:$0xff]
    %v42 = vld [vmem:[%s1 + $0xc8] sm:$0xff]
    %v43 = vld [vmem:[%s1 + $0xd0] sm:$0xff]
    %v44 = vld [vmem:[%s1 + $0xd8] sm:$0xff]
    %v45 = vld [vmem:[%s1 + $0xe0] sm:$0xff]
    %v46 = vld [vmem:[%s1 + $0xe8] sm:$0xff]
    %v47 = vld [vmem:[%s1 + $0xf0] sm:$0xff]
    %v48 = vld [vmem:[%s1 + $0xf8] sm:$0xff]
    %v49 = vld [vmem:[%s1 + $0x100] sm:$0xff]
    %v50 = vld [vmem:[%s1 + $0x108] sm:$0xff]
    %v51 = vld [vmem:[%s1 + $0x110] sm:$0xff]
    %v52 = vld [vmem:[%s1 + $0x118] sm:$0xff]
    %v53 = vld [vmem:[%s1 + $0x120] sm:$0xff]
    %v54 = vld [vmem:[%s1 + $0x128] sm:$0xff]
    %v55 = vld [vmem:[%s1 + $0x130] sm:$0xff]
    %v56 = vld [vmem:[%s1 + $0x138] sm:$0xff]
    %v57 = vld [vmem:[%s1 + $0x140] sm:$0xff]
    %v58 = vld [vmem:[%s1 + $0x148] sm:$0xff]
    %v59 = vld [vmem:[%s1 + $0x150] sm:$0xff]
    %v60 = vld [vmem:[%s1 + $0x158] sm:$0xff]
    %v61 = vld [vmem:[%s1 + $0x160] sm:$0xff]
    %v62 = vld [vmem:[%s1 + $0x168] sm:$0xff]
    %v63 = vld [vmem:[%s1 + $0x170] sm:$0xff]
    %v64 = vld [vmem:[%s1 + $0x178] sm:$0xff]
    %v65 = vld [vmem:[%s1 + $0x180] sm:$0xff]
    %v66 = vld [vmem:[%s1 + $0x188] sm:$0xff]
    %v67 = vld [vmem:[%s1 + $0x190] sm:$0xff]
    %v68 = vld [vmem:[%s1 + $0x198] sm:$0xff]
    %v69 = vld [vmem:[%s1 + $0x1a0] sm:$0xff]
    %v70 = vld [vmem:[%s1 + $0x1a8] sm:$0xff]
    %v71 = vld [vmem:[%s1 + $0x1b0] sm:$0xff]
    %v72 = vld [vmem:[%s1 + $0x1b8] sm:$0xff]
    %v73 = vld [vmem:[%s1 + $0x1c0] sm:$0xff]
    %v74 = vld [vmem:[%s1 + $0x1c8] sm:$0xff]
    %v75 = vld [vmem:[%s1 + $0x1d0] sm:$0xff]
    %v76 = vld [vmem:[%s1 + $0x1d8] sm:$0xff]
    %v77 = vld [vmem:[%s1 + $0x1e0] sm:$0xff]
    %v78 = vld [vmem:[%s1 + $0x1e8] sm:$0xff]
    %v79 = vld [vmem:[%s1 + $0x1f0] sm:$0xff]
    %v80 = vld [vmem:[%s1 + $0x1f8] sm:$0xff]
    %v81 = vld [vmem:[%s1 + $0x200] sm:$0xff]
    %v82 = vld [vmem:[%s1 + $0x208] sm:$0xff]
    %v83 = vld [vmem:[%s1 + $0x210] sm:$0xff]
    %v84 = vld [vmem:[%s1 + $0x218] sm:$0xff]
    %v85 = vld [vmem:[%s1 + $0x220] sm:$0xff]
    %v86 = vld [vmem:[%s1 + $0x228] sm:$0xff]
    %v87 = vld [vmem:[%s1 + $0x230] sm:$0xff]
    %v88 = vld [vmem:[%s1 + $0x238] sm:$0xff]
    %v89 = vld [vmem:[%s1 + $0x240] sm:$0xff]
    %v90 = vld [vmem:[%s1 + $0x248] sm:$0xff]
    %v91 = vld [vmem:[%s1 + $0x250] sm:$0xff]
    %v92 = vld [vmem:[%s1 + $0x258] sm:$0xff]
    %v93 = vld [vmem:[%s1 + $0x260] sm:$0xff]
    %v94 = vld [vmem:[%s1 + $0x268] sm:$0xff]
    %v95 = vld [vmem:[%s1 + $0x270] sm:$0xff]
    %v96 = vld [vmem:[%s1 + $0x278] sm:$0xff]
    %v97 = vld [vmem:[%s1 + $0x280] sm:$0xff]
    %v98 = vld [vmem:[%s1 + $0x288] sm:$0xff]
    %v99 = vld [vmem:[%s1 + $0x290] sm:$0xff]
    %v100 = vld [vmem:[%s1 + $0x298] sm:$0xff]
    %v101 = vld [vmem:[%s1 + $0x2a0] sm:$0xff]
    %v102 = vld [vmem:[%s1 + $0x2a8] sm:$0xff]
    %v103 = vld [vmem:[%s1 + $0x2b0] sm:$0xff]
    %v104 = vld [vmem:[%s1 + $0x2b8] sm:$0xff]
    %v105 = vld [vmem:[%s1 + $0x2c0] sm:$0xff]
    %v106 = vld [vmem:[%s1 + $0x2c8] sm:$0xff]
    %v107 = vld [vmem:[%s1 + $0x2d0] sm:$0xff]
    %v108 = vld [vmem:[%s1 + $0x2d8] sm:$0xff]
    %v109 = vld [vmem:[%s1 + $0x2e0] sm:$0xff]
    %v110 = vld [vmem:[%s1 + $0x2e8] sm:$0xff]
    %v111 = vld [vmem:[%s1 + $0x2f0] sm:$0xff]
    %v112 = vld [vmem:[%s1 + $0x2f8] sm:$0xff]
    %v113 = vld [vmem:[%s1 + $0x300] sm:$0xff]
    %v114 = vld [vmem:[%s1 + $0x308] sm:$0xff]
    %v115 = vld [vmem:[%s1 + $0x310] sm:$0xff]
    %v116 = vld [vmem:[%s1 + $0x318] sm:$0xff]
    %v117 = vld [vmem:[%s1 + $0x320] sm:$0xff]
    %v118 = vld [vmem:[%s1 + $0x328] sm:$0xff]
    %v119 = vld [vmem:[%s1 + $0x330] sm:$0xff]
    %v120 = vld [vmem:[%s1 + $0x338] sm:$0xff]
    %v121 = vld [vmem:[%s1 + $0x340] sm:$0xff]
    %v122 = vld [vmem:[%s1 + $0x348] sm:$0xff]
    %v123 = vld [vmem:[%s1 + $0x350] sm:$0xff]
    %v124 = vld [vmem:[%s1 + $0x358] sm:$0xff]
    %v125 = vld [vmem:[%s1 + $0x360] sm:$0xff]
    %v126 = vld [vmem:[%s1 + $0x368] sm:$0xff]
    %v127 = vld [vmem:[%s1 + $0x370] sm:$0xff]
    %v128 = vld [vmem:[%s1 + $0x378] sm:$0xff]
    %v129 = vld [vmem:[%s1 + $0x380] sm:$0xff]
    %v130 = vld [vmem:[%s1 + $0x388] sm:$0xff]
    %v131 = vld [vmem:[%s1 + $0x390] sm:$0xff]
    %v132 = vld [vmem:[%s1 + $0x398] sm:$0xff]
    %v133 = vld [vmem:[%s1 + $0x3a0] sm:$0xff]
    %v134 = vld [vmem:[%s1 + $0x3a8] sm:$0xff]
    %v135 = vld [vmem:[%s1 + $0x3b0] sm:$0xff]
    %v136 = vld [vmem:[%s1 + $0x3b8] sm:$0xff]
    %v137 = vld [vmem:[%s1 + $0x3c0] sm:$0xff]
    %v138 = vld [vmem:[%s1 + $0x3c8] sm:$0xff]
    %v139 = vld [vmem:[%s1 + $0x3d0] sm:$0xff]
    %v140 = vld [vmem:[%s1 + $0x3d8] sm:$0xff]
    %v141 = vld [vmem:[%s1 + $0x3e0] sm:$0xff]
    %v142 = vld [vmem:[%s1 + $0x3e8] sm:$0xff]
    %v143 = vld [vmem:[%s1 + $0x3f0] sm:$0xff]
    %v144 = vld [vmem:[%s1 + $0x3f8] sm:$0xff]
    %v145 = vld [vmem:[%s2 + $0xc0] sm:$0x1]
    %v146 = vperm.slane %v145, 0
    %149 = vst [vmem:[#allocation1] ss:$4 sm:$0xff] %v15
    %s150 = scalar_lea.vmem [#allocation1], 32
    %151 = vst [vmem:[%s150] ss:$4 sm:$0xff] %v16
    %v152 = vld.sshfl [vmem:[#allocation1] sm:$0xff pattern:$0x73625140]
    %v153 = vld.sshfl [vmem:[#allocation1 + $0x8] sm:$0xff pattern:$0x73625140]
    %v154 = vld.sshfl [vmem:[#allocation1 + $0x10] sm:$0xff pattern:$0x73625140]
    %v155 = vld.sshfl [vmem:[#allocation1 + $0x18] sm:$0xff pattern:$0x73625140]
    %v156 = vld.sshfl [vmem:[#allocation1 + $0x20] sm:$0xff pattern:$0x73625140]
    %v157 = vld.sshfl [vmem:[#allocation1 + $0x28] sm:$0xff pattern:$0x73625140]
    %v158 = vld.sshfl [vmem:[#allocation1 + $0x30] sm:$0xff pattern:$0x73625140]
    %v159 = vld.sshfl [vmem:[#allocation1 + $0x38] sm:$0xff pattern:$0x73625140]
    %168 = vmatpush.msra.mxu0 %v32
    %169 = vmatpush.msra.mxu0 %v31
    %170 = vmatpush.msra.mxu0 %v30
    %171 = vmatpush.msra.mxu0 %v29
    %172 = vmatpush.msra.mxu0 %v28
    %173 = vmatpush.msra.mxu0 %v27
    %174 = vmatpush.msra.mxu0 %v26
    %175 = vmatpush.msra.mxu0 %v25
    %176 = vmatpush.msra.mxu0 %v24
    %177 = vmatpush.msra.mxu0 %v23
    %178 = vmatpush.msra.mxu0 %v22
    %179 = vmatpush.msra.mxu0 %v21
    %180 = vmatpush.msra.mxu0 %v20
    %181 = vmatpush.msra.mxu0 %v19
    %182 = vmatpush.msra.mxu0 %v18
    %183 = vmatpush.msra.mxu0 %v17
    %184 = vmatmul.f32.gmra.mxu0 %v152
    %v185 = vpop.f32.mrf.mxu0
    %v186 = vadd.f32 %v146, %v185
    %187 = vdwg.mxu0
    %188 = vmatpush.msra.mxu0 %v48
    %189 = vmatpush.msra.mxu0 %v47
    %190 = vmatpush.msra.mxu0 %v46
    %191 = vmatpush.msra.mxu0 %v45
    %192 = vmatpush.msra.mxu0 %v44
    %193 = vmatpush.msra.mxu0 %v43
    %194 = vmatpush.msra.mxu0 %v42
    %195 = vmatpush.msra.mxu0 %v41
    %196 = vmatpush.msra.mxu0 %v40
    %197 = vmatpush.msra.mxu0 %v39
    %198 = vmatpush.msra.mxu0 %v38
    %199 = vmatpush.msra.mxu0 %v37
    %200 = vmatpush.msra.mxu0 %v36
    %201 = vmatpush.msra.mxu0 %v35
    %202 = vmatpush.msra.mxu0 %v34
    %203 = vmatpush.msra.mxu0 %v33
    %204 = vmatmul.f32.gmra.mxu0 %v153
    %v205 = vpop.f32.mrf.mxu0
    %v206 = vadd.f32 %v186, %v205
    %207 = vdwg.mxu0
    %208 = vmatpush.msra.mxu0 %v64
    %209 = vmatpush.msra.mxu0 %v63
    %210 = vmatpush.msra.mxu0 %v62
    %211 = vmatpush.msra.mxu0 %v61
    %212 = vmatpush.msra.mxu0 %v60
    %213 = vmatpush.msra.mxu0 %v59
    %214 = vmatpush.msra.mxu0 %v58
    %215 = vmatpush.msra.mxu0 %v57
    %216 = vmatpush.msra.mxu0 %v56
    %217 = vmatpush.msra.mxu0 %v55
    %218 = vmatpush.msra.mxu0 %v54
    %219 = vmatpush.msra.mxu0 %v53
    %220 = vmatpush.msra.mxu0 %v52
    %221 = vmatpush.msra.mxu0 %v51
    %222 = vmatpush.msra.mxu0 %v50
    %223 = vmatpush.msra.mxu0 %v49
    %224 = vmatmul.f32.gmra.mxu0 %v154
    %v225 = vpop.f32.mrf.mxu0
    %v226 = vadd.f32 %v206, %v225
    %227 = vdwg.mxu0
    %228 = vmatpush.msra.mxu0 %v80
    %229 = vmatpush.msra.mxu0 %v79
    %230 = vmatpush.msra.mxu0 %v78
    %231 = vmatpush.msra.mxu0 %v77
    %232 = vmatpush.msra.mxu0 %v76
    %233 = vmatpush.msra.mxu0 %v75
    %234 = vmatpush.msra.mxu0 %v74
    %235 = vmatpush.msra.mxu0 %v73
    %236 = vmatpush.msra.mxu0 %v72
    %237 = vmatpush.msra.mxu0 %v71
    %238 = vmatpush.msra.mxu0 %v70
    %239 = vmatpush.msra.mxu0 %v69
    %240 = vmatpush.msra.mxu0 %v68
    %241 = vmatpush.msra.mxu0 %v67
    %242 = vmatpush.msra.mxu0 %v66
    %243 = vmatpush.msra.mxu0 %v65
    %244 = vmatmul.f32.gmra.mxu0 %v155
    %v245 = vpop.f32.mrf.mxu0
    %v246 = vadd.f32 %v226, %v245
    %247 = vdwg.mxu0
    %248 = vmatpush.msra.mxu0 %v96
    %249 = vmatpush.msra.mxu0 %v95
    %250 = vmatpush.msra.mxu0 %v94
    %251 = vmatpush.msra.mxu0 %v93
    %252 = vmatpush.msra.mxu0 %v92
    %253 = vmatpush.msra.mxu0 %v91
    %254 = vmatpush.msra.mxu0 %v90
    %255 = vmatpush.msra.mxu0 %v89
    %256 = vmatpush.msra.mxu0 %v88
    %257 = vmatpush.msra.mxu0 %v87
    %258 = vmatpush.msra.mxu0 %v86
    %259 = vmatpush.msra.mxu0 %v85
    %260 = vmatpush.msra.mxu0 %v84
    %261 = vmatpush.msra.mxu0 %v83
    %262 = vmatpush.msra.mxu0 %v82
    %263 = vmatpush.msra.mxu0 %v81
    %264 = vmatmul.f32.gmra.mxu0 %v156
    %v265 = vpop.f32.mrf.mxu0
    %v266 = vadd.f32 %v246, %v265
    %267 = vdwg.mxu0
    %268 = vmatpush.msra.mxu0 %v112
    %269 = vmatpush.msra.mxu0 %v111
    %270 = vmatpush.msra.mxu0 %v110
    %271 = vmatpush.msra.mxu0 %v109
    %272 = vmatpush.msra.mxu0 %v108
    %273 = vmatpush.msra.mxu0 %v107
    %274 = vmatpush.msra.mxu0 %v106
    %275 = vmatpush.msra.mxu0 %v105
    %276 = vmatpush.msra.mxu0 %v104
    %277 = vmatpush.msra.mxu0 %v103
    %278 = vmatpush.msra.mxu0 %v102
    %279 = vmatpush.msra.mxu0 %v101
    %280 = vmatpush.msra.mxu0 %v100
    %281 = vmatpush.msra.mxu0 %v99
    %282 = vmatpush.msra.mxu0 %v98
    %283 = vmatpush.msra.mxu0 %v97
    %284 = vmatmul.f32.gmra.mxu0 %v157
    %v285 = vpop.f32.mrf.mxu0
    %v286 = vadd.f32 %v266, %v285
    %287 = vdwg.mxu0
    %288 = vmatpush.msra.mxu0 %v128
    %289 = vmatpush.msra.mxu0 %v127
    %290 = vmatpush.msra.mxu0 %v126
    %291 = vmatpush.msra.mxu0 %v125
    %292 = vmatpush.msra.mxu0 %v124
    %293 = vmatpush.msra.mxu0 %v123
    %294 = vmatpush.msra.mxu0 %v122
    %295 = vmatpush.msra.mxu0 %v121
    %296 = vmatpush.msra.mxu0 %v120
    %297 = vmatpush.msra.mxu0 %v119
    %298 = vmatpush.msra.mxu0 %v118
    %299 = vmatpush.msra.mxu0 %v117
    %300 = vmatpush.msra.mxu0 %v116
    %301 = vmatpush.msra.mxu0 %v115
    %302 = vmatpush.msra.mxu0 %v114
    %303 = vmatpush.msra.mxu0 %v113
    %304 = vmatmul.f32.gmra.mxu0 %v158
    %v305 = vpop.f32.mrf.mxu0
    %v306 = vadd.f32 %v286, %v305
    %307 = vdwg.mxu0
    %308 = vmatpush.msra.mxu0 %v144
    %309 = vmatpush.msra.mxu0 %v143
    %310 = vmatpush.msra.mxu0 %v142
    %311 = vmatpush.msra.mxu0 %v141
    %312 = vmatpush.msra.mxu0 %v140
    %313 = vmatpush.msra.mxu0 %v139
    %314 = vmatpush.msra.mxu0 %v138
    %315 = vmatpush.msra.mxu0 %v137
    %316 = vmatpush.msra.mxu0 %v136
    %317 = vmatpush.msra.mxu0 %v135
    %318 = vmatpush.msra.mxu0 %v134
    %319 = vmatpush.msra.mxu0 %v133
    %320 = vmatpush.msra.mxu0 %v132
    %321 = vmatpush.msra.mxu0 %v131
    %322 = vmatpush.msra.mxu0 %v130
    %323 = vmatpush.msra.mxu0 %v129
    %324 = vmatmul.f32.gmra.mxu0 %v159
    %v325 = vpop.f32.mrf.mxu0
    %v326 = vadd.f32 %v306, %v325
    %327 = vdwg.mxu0
    %v328 = vmax.f32 %v326, 0.0
    %v329 = vld [vmem:[%s2] sm:$0xff]
    %v330 = vld [vmem:[%s2 + $0x8] sm:$0xff]
    %v331 = vld [vmem:[%s2 + $0x10] sm:$0xff]
    %v332 = vld [vmem:[%s2 + $0x18] sm:$0xff]
    %v333 = vld [vmem:[%s2 + $0x20] sm:$0xff]
    %v334 = vld [vmem:[%s2 + $0x28] sm:$0xff]
    %v335 = vld [vmem:[%s2 + $0x30] sm:$0xff]
    %v336 = vld [vmem:[%s2 + $0x38] sm:$0xff]
    %v337 = vld [vmem:[%s2 + $0xc8] sm:$0x1]
    %v338 = vperm.slane %v337, 0
    %vm339 = vcmask 523264
    %v341 = vsel %vm339, %v328, 0
    %343 = vmatpush.msra.mxu0 0.0
    %344 = vmatpush.msra.mxu0 0.0
    %345 = vmatpush.msra.mxu0 0.0
    %346 = vmatpush.msra.mxu0 0.0
    %347 = vmatpush.msra.mxu0 0.0
    %348 = vmatpush.msra.mxu0 0.0
    %349 = vmatpush.msra.mxu0 0.0
    %350 = vmatpush.msra.mxu0 0.0
    %351 = vmatpush.msra.mxu0 %v336
    %352 = vmatpush.msra.mxu0 %v335
    %353 = vmatpush.msra.mxu0 %v334
    %354 = vmatpush.msra.mxu0 %v333
    %355 = vmatpush.msra.mxu0 %v332
    %356 = vmatpush.msra.mxu0 %v331
    %357 = vmatpush.msra.mxu0 %v330
    %358 = vmatpush.msra.mxu0 %v329
    %359 = vmatmul.f32.gmra.mxu0 %v341
    %v360 = vpop.f32.mrf.mxu0
    %v361 = vadd.f32 %v338, %v360
    %362 = vdwg.mxu0
    %v363 = vmul.f32 %v361, 0.5
    %v364 = vmul.f32 %v361, 0.70710677
    %v365 = vmul.f32 %v364, %v364
    %v366 = vmin.f32 16.0, %v365
    %v367 = vmul.f32 %v366, 2.1237322e-06
    %v368 = vadd.f32 %v367, 0.00028619796
    %v369 = vmul.f32 %v366, %v368
    %v370 = vadd.f32 %v369, 0.0036580483
    %v371 = vmul.f32 %v366, %v370
    %v372 = vadd.f32 %v371, 0.05243302
    %v373 = vmul.f32 %v366, %v372
    %v374 = vadd.f32 %v373, 0.18741608
    %v375 = vmul.f32 %v366, %v374
    %v376 = vadd.f32 %v375, 1.1283791
    %v377 = vmul.f32 %v364, %v376
    %v378 = vmul.f32 %v366, 3.8918573e-05
    %v379 = vadd.f32 %v378, 0.001143296
    %v380 = vmul.f32 %v366, %v379
    %v381 = vadd.f32 %v380, 0.014752088
    %v382 = vmul.f32 %v366, %v381
    %v383 = vadd.f32 %v382, 0.112945676
    %v384 = vmul.f32 %v366, %v383
    %v385 = vadd.f32 %v384, 0.4994258
    %v386 = vmul.f32 %v366, %v385
    %v387 = vadd.f32 %v386, 1.0
    %v388 = vrcp.pop %v387
    %v389 = vmul.f32 %v387, %v388
    %v390 = vsub.f32 1.0, %v389
    %v391 = vmul.f32 %v388, %v390
    %v392 = vadd.f32 %v388, %v391
    %vm393 = vweird.f32 %v387
    %vm394 = vweird.f32 %v388
    %vm395 = vmor %vm393, %vm394
    %v396 = vsel %vm395, %v388, %v392
    %v397 = vand.u32 2147483647, %v387
    %vm398 = vcmp.eq.f32.partialorder %v397, 8.507059e+37
    %v399 = vand.u32 %v387, 2147483648
    %v400 = vor.u32 1.1754944e-38, %v399
    %v401 = vsel %vm398, %v400, %v396
    %v402 = vmul.f32 %v377, %v401
    %v403 = vmin.f32 %v402, 1.0
    %v404 = vmax.f32 %v403, -1.0
    %v405 = vadd.f32 %v404, 1.0
    %v406 = vmul.f32 %v363, %v405
    %v407 = vld [vmem:[%s2 + $0x40] sm:$0xff]
    %v408 = vld [vmem:[%s2 + $0x48] sm:$0xff]
    %v409 = vld [vmem:[%s2 + $0x50] sm:$0xff]
    %v410 = vld [vmem:[%s2 + $0x58] sm:$0xff]
    %v411 = vld [vmem:[%s2 + $0x60] sm:$0xff]
    %v412 = vld [vmem:[%s2 + $0x68] sm:$0xff]
    %v413 = vld [vmem:[%s2 + $0x70] sm:$0xff]
    %v414 = vld [vmem:[%s2 + $0x78] sm:$0xff]
    %v415 = vld [vmem:[%s2 + $0x80] sm:$0xff]
    %v416 = vld [vmem:[%s2 + $0x88] sm:$0xff]
    %v417 = vld [vmem:[%s2 + $0x90] sm:$0xff]
    %v418 = vld [vmem:[%s2 + $0x98] sm:$0xff]
    %v419 = vld [vmem:[%s2 + $0xa0] sm:$0xff]
    %v420 = vld [vmem:[%s2 + $0xa8] sm:$0xff]
    %v421 = vld [vmem:[%s2 + $0xb0] sm:$0xff]
    %v422 = vld [vmem:[%s2 + $0xb8] sm:$0xff]
    %v423 = vld [vmem:[%s2 + $0xd0] sm:$0x1]
    %v424 = vperm.slane %v423, 0
    %425 = vmatpush.msra.mxu0 %v422
    %426 = vmatpush.msra.mxu0 %v421
    %427 = vmatpush.msra.mxu0 %v420
    %428 = vmatpush.msra.mxu0 %v419
    %429 = vmatpush.msra.mxu0 %v418
    %430 = vmatpush.msra.mxu0 %v417
    %431 = vmatpush.msra.mxu0 %v416
    %432 = vmatpush.msra.mxu0 %v415
    %433 = vmatpush.msra.mxu0 %v414
    %434 = vmatpush.msra.mxu0 %v413
    %435 = vmatpush.msra.mxu0 %v412
    %436 = vmatpush.msra.mxu0 %v411
    %437 = vmatpush.msra.mxu0 %v410
    %438 = vmatpush.msra.mxu0 %v409
    %439 = vmatpush.msra.mxu0 %v408
    %440 = vmatpush.msra.mxu0 %v407
    %441 = vmatmul.f32.gmra.mxu0 %v406
    %v442 = vpop.f32.mrf.mxu0
    %v443 = vadd.f32 %v424, %v442
    %444 = vdwg.mxu0
    %445 = vst [vmem:[#allocation2] sm:$0x3] %v443
    // Predicated region
    $region14: #{tpu_custom_call.1} parent=1 // pred_check
      _
    $region15: #{tpu_custom_call.1} parent=1 // pred_check_branch
      %447 = sbr.rel (0) target = $region17
    $region16: #{tpu_custom_call.1} parent=1 // pred_region
      %449 = vsyncadd [#allocation3], 0
      %s451 = sshll.u32 [#allocation2], 4
      %s452 = int_to_ptr.vmem [resolvable:$true] %s451
      %s453 = sshll.u32 %s3, 4
      %s454 = int_to_ptr.hbm [resolvable:$true] %s453
      %456 = dma.vmem_to_hbm [thread:$0]  %s452, 32, %s454, [#allocation3]
    $region17: #{tpu_custom_call.1} parent=1 // pred_fallthru
      _
    // Predicated region
    $region18: #{tpu_custom_call.1} parent=1 // pred_check
      _
    $region19: #{tpu_custom_call.1} parent=1 // pred_check_branch
      %458 = sbr.rel (0) target = $region21
    $region20: #{tpu_custom_call.1} parent=1 // pred_region
      %460 = dma.done [#allocation3], 32
    $region21: #{tpu_custom_call.1} parent=1 // pred_fallthru
      _
    %461 = vsyncpa [#allocation3], 1

</llo_original>
